<compile_context>
chip_gen: v7x
topology: tpu7x:2x2x1
jax: 0.10.0
libtpu: 0.0.40
codegen_flags: <defaults>
</compile_context>

<pallas_src>
import jax
import jax.numpy as jnp
from jax.experimental import pallas as pl
from jax.experimental.pallas import tpu as pltpu


HUNITS = [1, 10, 5, 1]           # same default as the PyTorch module
H_IN, H1, H2, H_OUT = HUNITS

# packed parameter layout (flat f32 vector in SMEM)
OFF_W1 = 0
OFF_B1 = OFF_W1 + H_IN * H1      # 10
OFF_W2 = OFF_B1 + H1             # 20   (row-major: w2[j, k] -> OFF_W2 + j*H2 + k)
OFF_B2 = OFF_W2 + H1 * H2        # 70
OFF_W3 = OFF_B2 + H2             # 75
N_PARAMS = OFF_W3 + H2 * H_OUT   # 80

LANES = 128                      # batch samples per lane-plane column
CHUNK = 32                       # rows processed per inner-loop step (4 vregs/plane)


def bnn_kernel(p_ref, x_ref, o_ref):
    """x_ref/o_ref: (tile_rows, 128) f32 batch planes; p_ref: (80,) f32 in SMEM."""
    # Hoist all weight/bias scalars out of the chunk loop (cheap SMEM loads).
    w1 = [p_ref[OFF_W1 + j] for j in range(H1)]
    b1 = [p_ref[OFF_B1 + j] for j in range(H1)]
    w2 = [p_ref[OFF_W2 + i] for i in range(H1 * H2)]
    b2 = [p_ref[OFF_B2 + k] for k in range(H2)]
    w3 = [p_ref[OFF_W3 + k] for k in range(H2)]

    tile_rows = x_ref.shape[0]

    @pl.loop(0, tile_rows // CHUNK)
    def _(c):
        row = pl.multiple_of(c * CHUNK, CHUNK)
        xs = x_ref[pl.ds(row, CHUNK), :]                      # (CHUNK, 128) samples

        # Layer 1 (1 -> 10) fused with layer 2 (10 -> 5): pure VPU broadcast FMAs.
        h1 = jnp.maximum(xs * w1[0] + b1[0], 0.0)
        acc = [h1 * w2[k] + b2[k] for k in range(H2)]
        for j in range(1, H1):
            h1 = jnp.maximum(xs * w1[j] + b1[j], 0.0)
            for k in range(H2):
                acc[k] = acc[k] + h1 * w2[j * H2 + k]

        # Layer 2 ReLU, then layer 3 (5 -> 1, no bias, Identity).
        y = jnp.maximum(acc[0], 0.0) * w3[0]
        for k in range(1, H2):
            y = y + jnp.maximum(acc[k], 0.0) * w3[k]

        o_ref[pl.ds(row, CHUNK), :] = y                       # dense 128-lane store


def bnn_forward(x, packed_params, *, tile_rows=512):
    """x: (N, 1) f32, packed_params: (80,) f32. Returns (N, 1) f32."""
    N, d_in = x.shape
    assert d_in == H_IN == 1

    rows_needed = -(-N // LANES)                              # ceil(N / 128)
    # Cap tile so tiny inputs don't over-pad; keep it a multiple of CHUNK.
    half_rows = -(-rows_needed // 2)
    tr = max(CHUNK, min(tile_rows, -(-half_rows // CHUNK) * CHUNK))
    num_tiles = max(2, -(-rows_needed // tr))                 # >=2 steps -> both v7x TCs
    R = num_tiles * tr
    n_pad = R * LANES

    x_flat = jnp.pad(x.reshape(-1), (0, n_pad - N))           # zero-pad tail samples
    x2 = x_flat.reshape(R, LANES)                             # batch-on-lanes layout

    out2 = pl.pallas_call(
        bnn_kernel,
        out_shape=jax.ShapeDtypeStruct((R, LANES), jnp.float32),
        grid_spec=pltpu.PrefetchScalarGridSpec(
            num_scalar_prefetch=0,
            grid=(num_tiles,),
            in_specs=[
                # packed weights/biases: one tiny SMEM buffer, no per-layer DMAs
                pl.BlockSpec(memory_space=pltpu.MemorySpace.SMEM),
                # batch plane tile, lane-dense
                pl.BlockSpec((tr, LANES), lambda i: (i, 0)),
            ],
            out_specs=pl.BlockSpec((tr, LANES), lambda i: (i, 0)),
        ),
        compiler_params=pltpu.CompilerParams(
            dimension_semantics=("parallel",),
        ),
    )(packed_params, x2)

    return out2.reshape(-1)[:N].reshape(N, H_OUT)


def pack_params(w1, b1, w2, b2, w3):
    return jnp.concatenate([w1.reshape(-1), b1.reshape(-1), w2.reshape(-1),
                            b2.reshape(-1), w3.reshape(-1)]).astype(jnp.float32)


def reference_forward(x, w1, b1, w2, b2, w3):
    h1 = jnp.maximum(x @ w1 + b1, 0.0)
    h2 = jnp.maximum(h1 @ w2 + b2, 0.0)
    return h2 @ w3


def init_params(key):
    # Deterministic synthetic init (stands in for Hidden.reset_parameters'
    # prior sampling — Gaussian draws, not a checkpoint load).
    k1, k2, k3, k4, k5 = jax.random.split(key, 5)
    w1 = jax.random.normal(k1, (H_IN, H1), jnp.float32)
    b1 = jax.random.normal(k2, (1, H1), jnp.float32)
    w2 = jax.random.normal(k3, (H1, H2), jnp.float32)
    b2 = jax.random.normal(k4, (1, H2), jnp.float32)
    w3 = jax.random.normal(k5, (H2, H_OUT), jnp.float32)
    # TODO(synk): heteroscedastic sigma_ / TransformedDistribution sampling and
    # prior_log_prob have no Pallas equivalent and don't affect forward(); omitted.
    return w1, b1, w2, b2, w3


if __name__ == "__main__":
    key = jax.random.PRNGKey(0)
    kx, kx2, kp = jax.random.split(key, 3)

    params = init_params(kp)
    packed = pack_params(*params)
    assert packed.shape == (N_PARAMS,)

    # Small batch, X ~ Uniform(-10, 10) matching sample_model's input distribution.
    N = 16
    x = jax.random.uniform(kx, (N, H_IN), jnp.float32, -10.0, 10.0)
    out = jax.block_until_ready(bnn_forward(x, packed))
    ref = reference_forward(x, *params)
    assert out.shape == (N, H_OUT)
    assert jnp.allclose(out, ref, atol=1e-5, rtol=1e-5), "mismatch vs reference (N=16)"

    # Ragged batch (not a multiple of 8/128) to exercise the padded tail path.
    N2 = 300
    x2 = jax.random.uniform(kx2, (N2, H_IN), jnp.float32, -10.0, 10.0)
    out2 = jax.block_until_ready(bnn_forward(x2, packed))
    ref2 = reference_forward(x2, *params)
    assert out2.shape == (N2, H_OUT)
    assert jnp.allclose(out2, ref2, atol=1e-5, rtol=1e-5), "mismatch vs reference (N=300)"

    print("KERNEL_OK")
</pallas_src>

<mosaic_0001>
module attributes {stable_mosaic.version = 11 : i64} {
  func.func @bnn_kernel(%arg0: i32, %arg1: memref<80xf32, #tpu.memory_space<smem>>, %arg2: memref<32x128xf32, #tpu.memory_space<vmem>>, %arg3: memref<32x128xf32, #tpu.memory_space<vmem>>) attributes {dimension_semantics = [#tpu.dimension_semantics<parallel>], iteration_bounds = array<i64: 2>, scalar_prefetch = 0 : i64, scratch_operands = 0 : i64, tpu.core_type = #tpu.core_type<tc>, window_params = [{transform_indices = @transform_0, window_bounds = array<i64: 80>}, {transform_indices = @transform_1, window_bounds = array<i64: 32, 128>}, {transform_indices = @transform_2, window_bounds = array<i64: 32, 128>}]} {
    %c0 = arith.constant 0 : index
    %0 = memref.load %arg1[%c0] : memref<80xf32, #tpu.memory_space<smem>>
    %c1 = arith.constant 1 : index
    %1 = memref.load %arg1[%c1] : memref<80xf32, #tpu.memory_space<smem>>
    %c2 = arith.constant 2 : index
    %2 = memref.load %arg1[%c2] : memref<80xf32, #tpu.memory_space<smem>>
    %c3 = arith.constant 3 : index
    %3 = memref.load %arg1[%c3] : memref<80xf32, #tpu.memory_space<smem>>
    %c4 = arith.constant 4 : index
    %4 = memref.load %arg1[%c4] : memref<80xf32, #tpu.memory_space<smem>>
    %c5 = arith.constant 5 : index
    %5 = memref.load %arg1[%c5] : memref<80xf32, #tpu.memory_space<smem>>
    %c6 = arith.constant 6 : index
    %6 = memref.load %arg1[%c6] : memref<80xf32, #tpu.memory_space<smem>>
    %c7 = arith.constant 7 : index
    %7 = memref.load %arg1[%c7] : memref<80xf32, #tpu.memory_space<smem>>
    %c8 = arith.constant 8 : index
    %8 = memref.load %arg1[%c8] : memref<80xf32, #tpu.memory_space<smem>>
    %c9 = arith.constant 9 : index
    %9 = memref.load %arg1[%c9] : memref<80xf32, #tpu.memory_space<smem>>
    %c10 = arith.constant 10 : index
    %10 = memref.load %arg1[%c10] : memref<80xf32, #tpu.memory_space<smem>>
    %c11 = arith.constant 11 : index
    %11 = memref.load %arg1[%c11] : memref<80xf32, #tpu.memory_space<smem>>
    %c12 = arith.constant 12 : index
    %12 = memref.load %arg1[%c12] : memref<80xf32, #tpu.memory_space<smem>>
    %c13 = arith.constant 13 : index
    %13 = memref.load %arg1[%c13] : memref<80xf32, #tpu.memory_space<smem>>
    %c14 = arith.constant 14 : index
    %14 = memref.load %arg1[%c14] : memref<80xf32, #tpu.memory_space<smem>>
    %c15 = arith.constant 15 : index
    %15 = memref.load %arg1[%c15] : memref<80xf32, #tpu.memory_space<smem>>
    %c16 = arith.constant 16 : index
    %16 = memref.load %arg1[%c16] : memref<80xf32, #tpu.memory_space<smem>>
    %c17 = arith.constant 17 : index
    %17 = memref.load %arg1[%c17] : memref<80xf32, #tpu.memory_space<smem>>
    %c18 = arith.constant 18 : index
    %18 = memref.load %arg1[%c18] : memref<80xf32, #tpu.memory_space<smem>>
    %c19 = arith.constant 19 : index
    %19 = memref.load %arg1[%c19] : memref<80xf32, #tpu.memory_space<smem>>
    %c20 = arith.constant 20 : index
    %20 = memref.load %arg1[%c20] : memref<80xf32, #tpu.memory_space<smem>>
    %c21 = arith.constant 21 : index
    %21 = memref.load %arg1[%c21] : memref<80xf32, #tpu.memory_space<smem>>
    %c22 = arith.constant 22 : index
    %22 = memref.load %arg1[%c22] : memref<80xf32, #tpu.memory_space<smem>>
    %c23 = arith.constant 23 : index
    %23 = memref.load %arg1[%c23] : memref<80xf32, #tpu.memory_space<smem>>
    %c24 = arith.constant 24 : index
    %24 = memref.load %arg1[%c24] : memref<80xf32, #tpu.memory_space<smem>>
    %c25 = arith.constant 25 : index
    %25 = memref.load %arg1[%c25] : memref<80xf32, #tpu.memory_space<smem>>
    %c26 = arith.constant 26 : index
    %26 = memref.load %arg1[%c26] : memref<80xf32, #tpu.memory_space<smem>>
    %c27 = arith.constant 27 : index
    %27 = memref.load %arg1[%c27] : memref<80xf32, #tpu.memory_space<smem>>
    %c28 = arith.constant 28 : index
    %28 = memref.load %arg1[%c28] : memref<80xf32, #tpu.memory_space<smem>>
    %c29 = arith.constant 29 : index
    %29 = memref.load %arg1[%c29] : memref<80xf32, #tpu.memory_space<smem>>
    %c30 = arith.constant 30 : index
    %30 = memref.load %arg1[%c30] : memref<80xf32, #tpu.memory_space<smem>>
    %c31 = arith.constant 31 : index
    %31 = memref.load %arg1[%c31] : memref<80xf32, #tpu.memory_space<smem>>
    %c32 = arith.constant 32 : index
    %32 = memref.load %arg1[%c32] : memref<80xf32, #tpu.memory_space<smem>>
    %c33 = arith.constant 33 : index
    %33 = memref.load %arg1[%c33] : memref<80xf32, #tpu.memory_space<smem>>
    %c34 = arith.constant 34 : index
    %34 = memref.load %arg1[%c34] : memref<80xf32, #tpu.memory_space<smem>>
    %c35 = arith.constant 35 : index
    %35 = memref.load %arg1[%c35] : memref<80xf32, #tpu.memory_space<smem>>
    %c36 = arith.constant 36 : index
    %36 = memref.load %arg1[%c36] : memref<80xf32, #tpu.memory_space<smem>>
    %c37 = arith.constant 37 : index
    %37 = memref.load %arg1[%c37] : memref<80xf32, #tpu.memory_space<smem>>
    %c38 = arith.constant 38 : index
    %38 = memref.load %arg1[%c38] : memref<80xf32, #tpu.memory_space<smem>>
    %c39 = arith.constant 39 : index
    %39 = memref.load %arg1[%c39] : memref<80xf32, #tpu.memory_space<smem>>
    %c40 = arith.constant 40 : index
    %40 = memref.load %arg1[%c40] : memref<80xf32, #tpu.memory_space<smem>>
    %c41 = arith.constant 41 : index
    %41 = memref.load %arg1[%c41] : memref<80xf32, #tpu.memory_space<smem>>
    %c42 = arith.constant 42 : index
    %42 = memref.load %arg1[%c42] : memref<80xf32, #tpu.memory_space<smem>>
    %c43 = arith.constant 43 : index
    %43 = memref.load %arg1[%c43] : memref<80xf32, #tpu.memory_space<smem>>
    %c44 = arith.constant 44 : index
    %44 = memref.load %arg1[%c44] : memref<80xf32, #tpu.memory_space<smem>>
    %c45 = arith.constant 45 : index
    %45 = memref.load %arg1[%c45] : memref<80xf32, #tpu.memory_space<smem>>
    %c46 = arith.constant 46 : index
    %46 = memref.load %arg1[%c46] : memref<80xf32, #tpu.memory_space<smem>>
    %c47 = arith.constant 47 : index
    %47 = memref.load %arg1[%c47] : memref<80xf32, #tpu.memory_space<smem>>
    %c48 = arith.constant 48 : index
    %48 = memref.load %arg1[%c48] : memref<80xf32, #tpu.memory_space<smem>>
    %c49 = arith.constant 49 : index
    %49 = memref.load %arg1[%c49] : memref<80xf32, #tpu.memory_space<smem>>
    %c50 = arith.constant 50 : index
    %50 = memref.load %arg1[%c50] : memref<80xf32, #tpu.memory_space<smem>>
    %c51 = arith.constant 51 : index
    %51 = memref.load %arg1[%c51] : memref<80xf32, #tpu.memory_space<smem>>
    %c52 = arith.constant 52 : index
    %52 = memref.load %arg1[%c52] : memref<80xf32, #tpu.memory_space<smem>>
    %c53 = arith.constant 53 : index
    %53 = memref.load %arg1[%c53] : memref<80xf32, #tpu.memory_space<smem>>
    %c54 = arith.constant 54 : index
    %54 = memref.load %arg1[%c54] : memref<80xf32, #tpu.memory_space<smem>>
    %c55 = arith.constant 55 : index
    %55 = memref.load %arg1[%c55] : memref<80xf32, #tpu.memory_space<smem>>
    %c56 = arith.constant 56 : index
    %56 = memref.load %arg1[%c56] : memref<80xf32, #tpu.memory_space<smem>>
    %c57 = arith.constant 57 : index
    %57 = memref.load %arg1[%c57] : memref<80xf32, #tpu.memory_space<smem>>
    %c58 = arith.constant 58 : index
    %58 = memref.load %arg1[%c58] : memref<80xf32, #tpu.memory_space<smem>>
    %c59 = arith.constant 59 : index
    %59 = memref.load %arg1[%c59] : memref<80xf32, #tpu.memory_space<smem>>
    %c60 = arith.constant 60 : index
    %60 = memref.load %arg1[%c60] : memref<80xf32, #tpu.memory_space<smem>>
    %c61 = arith.constant 61 : index
    %61 = memref.load %arg1[%c61] : memref<80xf32, #tpu.memory_space<smem>>
    %c62 = arith.constant 62 : index
    %62 = memref.load %arg1[%c62] : memref<80xf32, #tpu.memory_space<smem>>
    %c63 = arith.constant 63 : index
    %63 = memref.load %arg1[%c63] : memref<80xf32, #tpu.memory_space<smem>>
    %c64 = arith.constant 64 : index
    %64 = memref.load %arg1[%c64] : memref<80xf32, #tpu.memory_space<smem>>
    %c65 = arith.constant 65 : index
    %65 = memref.load %arg1[%c65] : memref<80xf32, #tpu.memory_space<smem>>
    %c66 = arith.constant 66 : index
    %66 = memref.load %arg1[%c66] : memref<80xf32, #tpu.memory_space<smem>>
    %c67 = arith.constant 67 : index
    %67 = memref.load %arg1[%c67] : memref<80xf32, #tpu.memory_space<smem>>
    %c68 = arith.constant 68 : index
    %68 = memref.load %arg1[%c68] : memref<80xf32, #tpu.memory_space<smem>>
    %c69 = arith.constant 69 : index
    %69 = memref.load %arg1[%c69] : memref<80xf32, #tpu.memory_space<smem>>
    %c70 = arith.constant 70 : index
    %70 = memref.load %arg1[%c70] : memref<80xf32, #tpu.memory_space<smem>>
    %c71 = arith.constant 71 : index
    %71 = memref.load %arg1[%c71] : memref<80xf32, #tpu.memory_space<smem>>
    %c72 = arith.constant 72 : index
    %72 = memref.load %arg1[%c72] : memref<80xf32, #tpu.memory_space<smem>>
    %c73 = arith.constant 73 : index
    %73 = memref.load %arg1[%c73] : memref<80xf32, #tpu.memory_space<smem>>
    %c74 = arith.constant 74 : index
    %74 = memref.load %arg1[%c74] : memref<80xf32, #tpu.memory_space<smem>>
    %c75 = arith.constant 75 : index
    %75 = memref.load %arg1[%c75] : memref<80xf32, #tpu.memory_space<smem>>
    %c76 = arith.constant 76 : index
    %76 = memref.load %arg1[%c76] : memref<80xf32, #tpu.memory_space<smem>>
    %c77 = arith.constant 77 : index
    %77 = memref.load %arg1[%c77] : memref<80xf32, #tpu.memory_space<smem>>
    %c78 = arith.constant 78 : index
    %78 = memref.load %arg1[%c78] : memref<80xf32, #tpu.memory_space<smem>>
    %c79 = arith.constant 79 : index
    %79 = memref.load %arg1[%c79] : memref<80xf32, #tpu.memory_space<smem>>
    %c0_i32 = arith.constant 0 : i32
    %c1_i32 = arith.constant 1 : i32
    %80 = arith.muli %c0_i32, %c1_i32 : i32
    %c0_i32_0 = arith.constant 0 : i32
    %81 = arith.addi %c0_i32_0, %80 : i32
    %c32_i32 = arith.constant 32 : i32
    %82 = arith.muli %81, %c32_i32 : i32
    %83 = tpu.assume_multiple %82, 32 : i32
    %84 = arith.index_cast %83 : i32 to index
    %c0_1 = arith.constant 0 : index
    %85 = vector.load %arg2[%84, %c0_1] : memref<32x128xf32, #tpu.memory_space<vmem>>, vector<32x128xf32>
    %86 = vector.broadcast %0 : f32 to vector<32x128xf32>
    %87 = arith.mulf %85, %86 : vector<32x128xf32>
    %88 = vector.broadcast %10 : f32 to vector<32x128xf32>
    %89 = arith.addf %87, %88 : vector<32x128xf32>
    %cst = arith.constant 0.000000e+00 : f32
    %90 = vector.broadcast %cst : f32 to vector<32x128xf32>
    %91 = arith.maximumf %89, %90 : vector<32x128xf32>
    %92 = vector.broadcast %20 : f32 to vector<32x128xf32>
    %93 = arith.mulf %91, %92 : vector<32x128xf32>
    %94 = vector.broadcast %70 : f32 to vector<32x128xf32>
    %95 = arith.addf %93, %94 : vector<32x128xf32>
    %96 = vector.broadcast %21 : f32 to vector<32x128xf32>
    %97 = arith.mulf %91, %96 : vector<32x128xf32>
    %98 = vector.broadcast %71 : f32 to vector<32x128xf32>
    %99 = arith.addf %97, %98 : vector<32x128xf32>
    %100 = vector.broadcast %22 : f32 to vector<32x128xf32>
    %101 = arith.mulf %91, %100 : vector<32x128xf32>
    %102 = vector.broadcast %72 : f32 to vector<32x128xf32>
    %103 = arith.addf %101, %102 : vector<32x128xf32>
    %104 = vector.broadcast %23 : f32 to vector<32x128xf32>
    %105 = arith.mulf %91, %104 : vector<32x128xf32>
    %106 = vector.broadcast %73 : f32 to vector<32x128xf32>
    %107 = arith.addf %105, %106 : vector<32x128xf32>
    %108 = vector.broadcast %24 : f32 to vector<32x128xf32>
    %109 = arith.mulf %91, %108 : vector<32x128xf32>
    %110 = vector.broadcast %74 : f32 to vector<32x128xf32>
    %111 = arith.addf %109, %110 : vector<32x128xf32>
    %112 = vector.broadcast %1 : f32 to vector<32x128xf32>
    %113 = arith.mulf %85, %112 : vector<32x128xf32>
    %114 = vector.broadcast %11 : f32 to vector<32x128xf32>
    %115 = arith.addf %113, %114 : vector<32x128xf32>
    %cst_2 = arith.constant 0.000000e+00 : f32
    %116 = vector.broadcast %cst_2 : f32 to vector<32x128xf32>
    %117 = arith.maximumf %115, %116 : vector<32x128xf32>
    %118 = vector.broadcast %25 : f32 to vector<32x128xf32>
    %119 = arith.mulf %117, %118 : vector<32x128xf32>
    %120 = arith.addf %95, %119 : vector<32x128xf32>
    %121 = vector.broadcast %26 : f32 to vector<32x128xf32>
    %122 = arith.mulf %117, %121 : vector<32x128xf32>
    %123 = arith.addf %99, %122 : vector<32x128xf32>
    %124 = vector.broadcast %27 : f32 to vector<32x128xf32>
    %125 = arith.mulf %117, %124 : vector<32x128xf32>
    %126 = arith.addf %103, %125 : vector<32x128xf32>
    %127 = vector.broadcast %28 : f32 to vector<32x128xf32>
    %128 = arith.mulf %117, %127 : vector<32x128xf32>
    %129 = arith.addf %107, %128 : vector<32x128xf32>
    %130 = vector.broadcast %29 : f32 to vector<32x128xf32>
    %131 = arith.mulf %117, %130 : vector<32x128xf32>
    %132 = arith.addf %111, %131 : vector<32x128xf32>
    %133 = vector.broadcast %2 : f32 to vector<32x128xf32>
    %134 = arith.mulf %85, %133 : vector<32x128xf32>
    %135 = vector.broadcast %12 : f32 to vector<32x128xf32>
    %136 = arith.addf %134, %135 : vector<32x128xf32>
    %cst_3 = arith.constant 0.000000e+00 : f32
    %137 = vector.broadcast %cst_3 : f32 to vector<32x128xf32>
    %138 = arith.maximumf %136, %137 : vector<32x128xf32>
    %139 = vector.broadcast %30 : f32 to vector<32x128xf32>
    %140 = arith.mulf %138, %139 : vector<32x128xf32>
    %141 = arith.addf %120, %140 : vector<32x128xf32>
    %142 = vector.broadcast %31 : f32 to vector<32x128xf32>
    %143 = arith.mulf %138, %142 : vector<32x128xf32>
    %144 = arith.addf %123, %143 : vector<32x128xf32>
    %145 = vector.broadcast %32 : f32 to vector<32x128xf32>
    %146 = arith.mulf %138, %145 : vector<32x128xf32>
    %147 = arith.addf %126, %146 : vector<32x128xf32>
    %148 = vector.broadcast %33 : f32 to vector<32x128xf32>
    %149 = arith.mulf %138, %148 : vector<32x128xf32>
    %150 = arith.addf %129, %149 : vector<32x128xf32>
    %151 = vector.broadcast %34 : f32 to vector<32x128xf32>
    %152 = arith.mulf %138, %151 : vector<32x128xf32>
    %153 = arith.addf %132, %152 : vector<32x128xf32>
    %154 = vector.broadcast %3 : f32 to vector<32x128xf32>
    %155 = arith.mulf %85, %154 : vector<32x128xf32>
    %156 = vector.broadcast %13 : f32 to vector<32x128xf32>
    %157 = arith.addf %155, %156 : vector<32x128xf32>
    %cst_4 = arith.constant 0.000000e+00 : f32
    %158 = vector.broadcast %cst_4 : f32 to vector<32x128xf32>
    %159 = arith.maximumf %157, %158 : vector<32x128xf32>
    %160 = vector.broadcast %35 : f32 to vector<32x128xf32>
    %161 = arith.mulf %159, %160 : vector<32x128xf32>
    %162 = arith.addf %141, %161 : vector<32x128xf32>
    %163 = vector.broadcast %36 : f32 to vector<32x128xf32>
    %164 = arith.mulf %159, %163 : vector<32x128xf32>
    %165 = arith.addf %144, %164 : vector<32x128xf32>
    %166 = vector.broadcast %37 : f32 to vector<32x128xf32>
    %167 = arith.mulf %159, %166 : vector<32x128xf32>
    %168 = arith.addf %147, %167 : vector<32x128xf32>
    %169 = vector.broadcast %38 : f32 to vector<32x128xf32>
    %170 = arith.mulf %159, %169 : vector<32x128xf32>
    %171 = arith.addf %150, %170 : vector<32x128xf32>
    %172 = vector.broadcast %39 : f32 to vector<32x128xf32>
    %173 = arith.mulf %159, %172 : vector<32x128xf32>
    %174 = arith.addf %153, %173 : vector<32x128xf32>
    %175 = vector.broadcast %4 : f32 to vector<32x128xf32>
    %176 = arith.mulf %85, %175 : vector<32x128xf32>
    %177 = vector.broadcast %14 : f32 to vector<32x128xf32>
    %178 = arith.addf %176, %177 : vector<32x128xf32>
    %cst_5 = arith.constant 0.000000e+00 : f32
    %179 = vector.broadcast %cst_5 : f32 to vector<32x128xf32>
    %180 = arith.maximumf %178, %179 : vector<32x128xf32>
    %181 = vector.broadcast %40 : f32 to vector<32x128xf32>
    %182 = arith.mulf %180, %181 : vector<32x128xf32>
    %183 = arith.addf %162, %182 : vector<32x128xf32>
    %184 = vector.broadcast %41 : f32 to vector<32x128xf32>
    %185 = arith.mulf %180, %184 : vector<32x128xf32>
    %186 = arith.addf %165, %185 : vector<32x128xf32>
    %187 = vector.broadcast %42 : f32 to vector<32x128xf32>
    %188 = arith.mulf %180, %187 : vector<32x128xf32>
    %189 = arith.addf %168, %188 : vector<32x128xf32>
    %190 = vector.broadcast %43 : f32 to vector<32x128xf32>
    %191 = arith.mulf %180, %190 : vector<32x128xf32>
    %192 = arith.addf %171, %191 : vector<32x128xf32>
    %193 = vector.broadcast %44 : f32 to vector<32x128xf32>
    %194 = arith.mulf %180, %193 : vector<32x128xf32>
    %195 = arith.addf %174, %194 : vector<32x128xf32>
    %196 = vector.broadcast %5 : f32 to vector<32x128xf32>
    %197 = arith.mulf %85, %196 : vector<32x128xf32>
    %198 = vector.broadcast %15 : f32 to vector<32x128xf32>
    %199 = arith.addf %197, %198 : vector<32x128xf32>
    %cst_6 = arith.constant 0.000000e+00 : f32
    %200 = vector.broadcast %cst_6 : f32 to vector<32x128xf32>
    %201 = arith.maximumf %199, %200 : vector<32x128xf32>
    %202 = vector.broadcast %45 : f32 to vector<32x128xf32>
    %203 = arith.mulf %201, %202 : vector<32x128xf32>
    %204 = arith.addf %183, %203 : vector<32x128xf32>
    %205 = vector.broadcast %46 : f32 to vector<32x128xf32>
    %206 = arith.mulf %201, %205 : vector<32x128xf32>
    %207 = arith.addf %186, %206 : vector<32x128xf32>
    %208 = vector.broadcast %47 : f32 to vector<32x128xf32>
    %209 = arith.mulf %201, %208 : vector<32x128xf32>
    %210 = arith.addf %189, %209 : vector<32x128xf32>
    %211 = vector.broadcast %48 : f32 to vector<32x128xf32>
    %212 = arith.mulf %201, %211 : vector<32x128xf32>
    %213 = arith.addf %192, %212 : vector<32x128xf32>
    %214 = vector.broadcast %49 : f32 to vector<32x128xf32>
    %215 = arith.mulf %201, %214 : vector<32x128xf32>
    %216 = arith.addf %195, %215 : vector<32x128xf32>
    %217 = vector.broadcast %6 : f32 to vector<32x128xf32>
    %218 = arith.mulf %85, %217 : vector<32x128xf32>
    %219 = vector.broadcast %16 : f32 to vector<32x128xf32>
    %220 = arith.addf %218, %219 : vector<32x128xf32>
    %cst_7 = arith.constant 0.000000e+00 : f32
    %221 = vector.broadcast %cst_7 : f32 to vector<32x128xf32>
    %222 = arith.maximumf %220, %221 : vector<32x128xf32>
    %223 = vector.broadcast %50 : f32 to vector<32x128xf32>
    %224 = arith.mulf %222, %223 : vector<32x128xf32>
    %225 = arith.addf %204, %224 : vector<32x128xf32>
    %226 = vector.broadcast %51 : f32 to vector<32x128xf32>
    %227 = arith.mulf %222, %226 : vector<32x128xf32>
    %228 = arith.addf %207, %227 : vector<32x128xf32>
    %229 = vector.broadcast %52 : f32 to vector<32x128xf32>
    %230 = arith.mulf %222, %229 : vector<32x128xf32>
    %231 = arith.addf %210, %230 : vector<32x128xf32>
    %232 = vector.broadcast %53 : f32 to vector<32x128xf32>
    %233 = arith.mulf %222, %232 : vector<32x128xf32>
    %234 = arith.addf %213, %233 : vector<32x128xf32>
    %235 = vector.broadcast %54 : f32 to vector<32x128xf32>
    %236 = arith.mulf %222, %235 : vector<32x128xf32>
    %237 = arith.addf %216, %236 : vector<32x128xf32>
    %238 = vector.broadcast %7 : f32 to vector<32x128xf32>
    %239 = arith.mulf %85, %238 : vector<32x128xf32>
    %240 = vector.broadcast %17 : f32 to vector<32x128xf32>
    %241 = arith.addf %239, %240 : vector<32x128xf32>
    %cst_8 = arith.constant 0.000000e+00 : f32
    %242 = vector.broadcast %cst_8 : f32 to vector<32x128xf32>
    %243 = arith.maximumf %241, %242 : vector<32x128xf32>
    %244 = vector.broadcast %55 : f32 to vector<32x128xf32>
    %245 = arith.mulf %243, %244 : vector<32x128xf32>
    %246 = arith.addf %225, %245 : vector<32x128xf32>
    %247 = vector.broadcast %56 : f32 to vector<32x128xf32>
    %248 = arith.mulf %243, %247 : vector<32x128xf32>
    %249 = arith.addf %228, %248 : vector<32x128xf32>
    %250 = vector.broadcast %57 : f32 to vector<32x128xf32>
    %251 = arith.mulf %243, %250 : vector<32x128xf32>
    %252 = arith.addf %231, %251 : vector<32x128xf32>
    %253 = vector.broadcast %58 : f32 to vector<32x128xf32>
    %254 = arith.mulf %243, %253 : vector<32x128xf32>
    %255 = arith.addf %234, %254 : vector<32x128xf32>
    %256 = vector.broadcast %59 : f32 to vector<32x128xf32>
    %257 = arith.mulf %243, %256 : vector<32x128xf32>
    %258 = arith.addf %237, %257 : vector<32x128xf32>
    %259 = vector.broadcast %8 : f32 to vector<32x128xf32>
    %260 = arith.mulf %85, %259 : vector<32x128xf32>
    %261 = vector.broadcast %18 : f32 to vector<32x128xf32>
    %262 = arith.addf %260, %261 : vector<32x128xf32>
    %cst_9 = arith.constant 0.000000e+00 : f32
    %263 = vector.broadcast %cst_9 : f32 to vector<32x128xf32>
    %264 = arith.maximumf %262, %263 : vector<32x128xf32>
    %265 = vector.broadcast %60 : f32 to vector<32x128xf32>
    %266 = arith.mulf %264, %265 : vector<32x128xf32>
    %267 = arith.addf %246, %266 : vector<32x128xf32>
    %268 = vector.broadcast %61 : f32 to vector<32x128xf32>
    %269 = arith.mulf %264, %268 : vector<32x128xf32>
    %270 = arith.addf %249, %269 : vector<32x128xf32>
    %271 = vector.broadcast %62 : f32 to vector<32x128xf32>
    %272 = arith.mulf %264, %271 : vector<32x128xf32>
    %273 = arith.addf %252, %272 : vector<32x128xf32>
    %274 = vector.broadcast %63 : f32 to vector<32x128xf32>
    %275 = arith.mulf %264, %274 : vector<32x128xf32>
    %276 = arith.addf %255, %275 : vector<32x128xf32>
    %277 = vector.broadcast %64 : f32 to vector<32x128xf32>
    %278 = arith.mulf %264, %277 : vector<32x128xf32>
    %279 = arith.addf %258, %278 : vector<32x128xf32>
    %280 = vector.broadcast %9 : f32 to vector<32x128xf32>
    %281 = arith.mulf %85, %280 : vector<32x128xf32>
    %282 = vector.broadcast %19 : f32 to vector<32x128xf32>
    %283 = arith.addf %281, %282 : vector<32x128xf32>
    %cst_10 = arith.constant 0.000000e+00 : f32
    %284 = vector.broadcast %cst_10 : f32 to vector<32x128xf32>
    %285 = arith.maximumf %283, %284 : vector<32x128xf32>
    %286 = vector.broadcast %65 : f32 to vector<32x128xf32>
    %287 = arith.mulf %285, %286 : vector<32x128xf32>
    %288 = arith.addf %267, %287 : vector<32x128xf32>
    %289 = vector.broadcast %66 : f32 to vector<32x128xf32>
    %290 = arith.mulf %285, %289 : vector<32x128xf32>
    %291 = arith.addf %270, %290 : vector<32x128xf32>
    %292 = vector.broadcast %67 : f32 to vector<32x128xf32>
    %293 = arith.mulf %285, %292 : vector<32x128xf32>
    %294 = arith.addf %273, %293 : vector<32x128xf32>
    %295 = vector.broadcast %68 : f32 to vector<32x128xf32>
    %296 = arith.mulf %285, %295 : vector<32x128xf32>
    %297 = arith.addf %276, %296 : vector<32x128xf32>
    %298 = vector.broadcast %69 : f32 to vector<32x128xf32>
    %299 = arith.mulf %285, %298 : vector<32x128xf32>
    %300 = arith.addf %279, %299 : vector<32x128xf32>
    %cst_11 = arith.constant 0.000000e+00 : f32
    %301 = vector.broadcast %cst_11 : f32 to vector<32x128xf32>
    %302 = arith.maximumf %288, %301 : vector<32x128xf32>
    %303 = vector.broadcast %75 : f32 to vector<32x128xf32>
    %304 = arith.mulf %302, %303 : vector<32x128xf32>
    %cst_12 = arith.constant 0.000000e+00 : f32
    %305 = vector.broadcast %cst_12 : f32 to vector<32x128xf32>
    %306 = arith.maximumf %291, %305 : vector<32x128xf32>
    %307 = vector.broadcast %76 : f32 to vector<32x128xf32>
    %308 = arith.mulf %306, %307 : vector<32x128xf32>
    %309 = arith.addf %304, %308 : vector<32x128xf32>
    %cst_13 = arith.constant 0.000000e+00 : f32
    %310 = vector.broadcast %cst_13 : f32 to vector<32x128xf32>
    %311 = arith.maximumf %294, %310 : vector<32x128xf32>
    %312 = vector.broadcast %77 : f32 to vector<32x128xf32>
    %313 = arith.mulf %311, %312 : vector<32x128xf32>
    %314 = arith.addf %309, %313 : vector<32x128xf32>
    %cst_14 = arith.constant 0.000000e+00 : f32
    %315 = vector.broadcast %cst_14 : f32 to vector<32x128xf32>
    %316 = arith.maximumf %297, %315 : vector<32x128xf32>
    %317 = vector.broadcast %78 : f32 to vector<32x128xf32>
    %318 = arith.mulf %316, %317 : vector<32x128xf32>
    %319 = arith.addf %314, %318 : vector<32x128xf32>
    %cst_15 = arith.constant 0.000000e+00 : f32
    %320 = vector.broadcast %cst_15 : f32 to vector<32x128xf32>
    %321 = arith.maximumf %300, %320 : vector<32x128xf32>
    %322 = vector.broadcast %79 : f32 to vector<32x128xf32>
    %323 = arith.mulf %321, %322 : vector<32x128xf32>
    %324 = arith.addf %319, %323 : vector<32x128xf32>
    %325 = arith.index_cast %83 : i32 to index
    %c0_16 = arith.constant 0 : index
    %326 = vector.load %arg3[%325, %c0_16] : memref<32x128xf32, #tpu.memory_space<vmem>>, vector<32x128xf32>
    tpu.vector_store %arg3[%325, %c0_16], %324 {strides = array<i32>} : memref<32x128xf32, #tpu.memory_space<vmem>>, vector<32x128xf32>,
    %c1_i32_17 = arith.constant 1 : i32
    return
  }
  func.func @transform_0(%arg0: i32) -> i32 {
    %c0_i32 = arith.constant 0 : i32
    %c0_i32_0 = arith.constant 0 : i32
    return %c0_i32 : i32
  }
  func.func @transform_1(%arg0: i32) -> (i32, i32) {
    %c0_i32 = arith.constant 0 : i32
    %c0_i32_0 = arith.constant 0 : i32
    return %arg0, %c0_i32 : i32, i32
  }
  func.func @transform_2(%arg0: i32) -> (i32, i32) {
    %c0_i32 = arith.constant 0 : i32
    %c0_i32_0 = arith.constant 0 : i32
    return %arg0, %c0_i32 : i32, i32
  }
}

</mosaic_0001>

<llo_original>
// kernel: tpu_custom_call.1
$region0: #{tpu_custom_call.1}
  #allocation0 [shape = 'u32[]', space=smem, size = 0x4, offset = 0x4, fixed_abs, tag = 'smem constant byte address 0x4 - core index']
  #allocation1 [shape = 'u32[144,128]{1,0:T(1,128)}', space=vmem, size = 0x12000, scoped, tag = 'internal scratch']
  %s0 = inlined_call_operand.hbm [shape: f32[80], index: 0, kind: input, shape index: {}]
  %s1 = inlined_call_operand.hbm [shape: f32[64,128], index: 1, kind: input, shape index: {}]
  %s2 = inlined_call_operand.hbm [shape: f32[64,128], index: 2, kind: output, shape index: {}]
  %s3 = sld [smem:[#allocation0]]
  $region49: #{tpu_custom_call.1} parent=0
    _
  %s5 = ssub.s32 1, %s3
  %s6 = scalar_select 0, %s5, %s3
  $region1: #{tpu_custom_call.1} parent=0
    #allocation2 [shape = 'u8[512]{0}', space=smem, size = 0x200, scoped, tag = 'input window, operand 0, single buffered']
    #allocation3 [shape = 's32[2]{0}', space=sflag, size = 0x8, scoped, tag = 'scoped memory for tpu_custom_call.1']
    #allocation4 [shape = 's32[2]{0}', space=sflag, size = 0x8, scoped, tag = 'scoped memory for tpu_custom_call.1']
    #allocation5 [shape = 's32[2]{0}', space=sflag, size = 0x8, scoped, tag = 'scoped memory for tpu_custom_call.1']
    #allocation6 [shape = 'u8[32768]{0}', space=vmem, size = 0x8000, scoped, tag = 'input window, operand 1']
    #allocation7 [shape = 'u8[32768]{0}', space=vmem, size = 0x8000, scoped, tag = 'output window, operand 0']
    %7 = vsyncpa [#allocation5], 0
    %8 = vsyncpa [#allocation3], 0
    %s9 = scalar_lea.sflag [#allocation3], 1
    %10 = vsyncpa %s9, 0
    %11 = vsyncpa [#allocation4], 0
    %s12 = scalar_lea.sflag [#allocation4], 1
    %13 = vsyncpa %s12, 0
    loop: start=0, step=1, limit=4
    $region2: #{tpu_custom_call.1} parent=1 // loop_pre_header
      _
    $region3: #{tpu_custom_call.1} parent=1 // loop_header
      %s15 = sphi 0, %s19
      %p16 = scmp.ge.s32.totalorder %s15, 4
      %s23 = sphi 0, %s23
      %s25 = sphi 0, %s23
      %s26 = sphi 0, %s25
      %s40 = sphi 0, %s26
      %s46 = sphi 0, %s48
      %s49 = sphi 0, %s46
      %s50 = sphi 0, %s49
      %s66 = sphi 0, %s50
      %s72 = sphi 0, %s74
      %s75 = sphi 0, %s72
      %s76 = sphi 0, %s75
      %s92 = sphi 0, %s76
    $region4: #{tpu_custom_call.1} parent=1 // loop_header_branch
      %18 = sbr.rel (%p16) target = $region8
    $region5: #{tpu_custom_call.1} parent=1 // loop_body
      %s20 = ssub.s32 %s15, 1
      %s21 = ssub.s32 %s15, 2
      %s22 = sadd.s32 %s15, 1
      %s24 = sadd.s32 %s23, 1
      %p27 = scmp.eq.s32.totalorder %s15, 1
      %p28 = scmp.ne.s32.totalorder %s23, %s25
      %p29 = scmp.eq.s32.totalorder %s15, 0
      %p30 = por %p28, %p29
      %p31 = scmp.ne.s32.totalorder %s23, %s25
      %p32 = scmp.eq.s32.totalorder %s20, 1
      %p33 = por %p31, %p32
      %p34 = scmp.ne.s32.totalorder %s25, %s26
      %p35 = scmp.eq.s32.totalorder %s20, 0
      %p36 = por %p34, %p35
      %p37 = scmp.ne.s32.totalorder %s25, %s26
      %p38 = scmp.eq.s32.totalorder %s21, 1
      %p39 = por %p37, %p38
      %p41 = scmp.ne.s32.totalorder %s26, %s40
      %p42 = scmp.eq.s32.totalorder %s21, 0
      %p43 = por %p41, %p42
      %s44 = ssub.s32 %s15, %s22
      %p45 = scmp.eq.s32.totalorder %s44, 0
      %s47 = sadd.s32 %s46, 1
      %s48 = scalar_select %p45, %s46, %s47
      %p51 = pneg %p45
      %p52 = scmp.eq.s32.totalorder %s15, 1
      %p53 = por %p51, %p52
      %p54 = scmp.ne.s32.totalorder %s46, %s49
      %p55 = scmp.eq.s32.totalorder %s15, 0
      %p56 = por %p54, %p55
      %p57 = scmp.ne.s32.totalorder %s46, %s49
      %p58 = scmp.eq.s32.totalorder %s20, 1
      %p59 = por %p57, %p58
      %p60 = scmp.ne.s32.totalorder %s49, %s50
      %p61 = scmp.eq.s32.totalorder %s20, 0
      %p62 = por %p60, %p61
      %p63 = scmp.ne.s32.totalorder %s49, %s50
      %p64 = scmp.eq.s32.totalorder %s21, 1
      %p65 = por %p63, %p64
      %p67 = scmp.ne.s32.totalorder %s50, %s66
      %p68 = scmp.eq.s32.totalorder %s21, 0
      %p69 = por %p67, %p68
      %s70 = ssub.s32 %s15, %s22
      %p71 = scmp.eq.s32.totalorder %s70, 0
      %s73 = sadd.s32 %s72, 1
      %s74 = scalar_select %p71, %s72, %s73
      %p77 = pneg %p71
      %p78 = scmp.eq.s32.totalorder %s15, 1
      %p79 = por %p77, %p78
      %p80 = scmp.ne.s32.totalorder %s72, %s75
      %p81 = scmp.eq.s32.totalorder %s15, 0
      %p82 = por %p80, %p81
      %p83 = scmp.ne.s32.totalorder %s72, %s75
      %p84 = scmp.eq.s32.totalorder %s20, 1
      %p85 = por %p83, %p84
      %p86 = scmp.ne.s32.totalorder %s75, %s76
      %p87 = scmp.eq.s32.totalorder %s20, 0
      %p88 = por %p86, %p87
      %p89 = scmp.ne.s32.totalorder %s75, %s76
      %p90 = scmp.eq.s32.totalorder %s21, 1
      %p91 = por %p89, %p90
      %p93 = scmp.ne.s32.totalorder %s76, %s92
      %p94 = scmp.eq.s32.totalorder %s21, 0
      %p95 = por %p93, %p94
      %p96 = scmp.le.s32.totalorder 1, %s15
      %p97 = scmp.lt.s32.totalorder %s15, 3
      %p98 = pnand %p96, %p97
      %p99 = pneg %p98
      // Predicated region
      $region9: #{tpu_custom_call.1} parent=5 // pred_check
        _
      $region10: #{tpu_custom_call.1} parent=5 // pred_check_branch
        %101 = sbr.rel (%p98) target = $region12
      $region11: #{tpu_custom_call.1} parent=5 // pred_region
        %s102 = ssub.s32 %s15, 1
        // Predicated region
        $region13: #{tpu_custom_call.1} parent=11 // pred_check
          %p103 = pneg %p36
        $region14: #{tpu_custom_call.1} parent=11 // pred_check_branch
          %105 = sbr.rel (%p103) target = $region16
        $region15: #{tpu_custom_call.1} parent=11 // pred_region
          %s107 = ssub.s32 16, 16
          %108 = vsyncadd [#allocation5], %s107
          %111 = dma.hbm_to_smem %s0, 16, [#allocation2], [#allocation5]
        $region16: #{tpu_custom_call.1} parent=11 // pred_fallthru
          _
      $region12: #{tpu_custom_call.1} parent=5 // pred_fallthru
        _
      %p112 = scmp.lt.s32.totalorder %s15, 2
      // Predicated region
      $region17: #{tpu_custom_call.1} parent=5 // pred_check
        %p113 = pneg %p112
      $region18: #{tpu_custom_call.1} parent=5 // pred_check_branch
        %115 = sbr.rel (%p113) target = $region20
      $region19: #{tpu_custom_call.1} parent=5 // pred_region
        // Predicated region
        $region21: #{tpu_custom_call.1} parent=19 // pred_check
          %p116 = pneg %p56
        $region22: #{tpu_custom_call.1} parent=19 // pred_check_branch
          %118 = sbr.rel (%p116) target = $region24
        $region23: #{tpu_custom_call.1} parent=19 // pred_region
          %s119 = sand.u32 %s46, 1
          %s120 = scalar_lea.sflag [#allocation3], %s119
          %s121 = sand.u32 %s46, 1
          %s122 = smul.addr %s121, 32
          %s123 = scalar_lea.vmem [#allocation6], %s122
          %s124 = smul.u32 4, %s15
          %s126 = ssub.s32 512, 512
          %127 = vsyncadd %s120, %s126
          %s128 = smul.addr %s124, 128
          %s129 = scalar_lea.hbm %s1, %s128
          %s130 = sshll.u32 %s123, 4
          %s131 = int_to_ptr.vmem [resolvable:$true] %s130
          %136 = dma.hbm_to_vmem [thread:$0]  %s129, 512, %s131, %s120, 128, 128, 8
        $region24: #{tpu_custom_call.1} parent=19 // pred_fallthru
          _
      $region20: #{tpu_custom_call.1} parent=5 // pred_fallthru
        _
      %p137 = scmp.le.s32.totalorder 1, %s15
      %p138 = scmp.lt.s32.totalorder %s15, 3
      %p139 = pnand %p137, %p138
      %p140 = pneg %p139
      // Predicated region
      $region25: #{tpu_custom_call.1} parent=5 // pred_check
        _
      $region26: #{tpu_custom_call.1} parent=5 // pred_check_branch
        %142 = sbr.rel (%p139) target = $region28
      $region27: #{tpu_custom_call.1} parent=5 // pred_region
        %s143 = ssub.s32 %s15, 1
        // Predicated region
        $region29: #{tpu_custom_call.1} parent=27 // pred_check
          %p144 = pneg %p36
        $region30: #{tpu_custom_call.1} parent=27 // pred_check_branch
          %146 = sbr.rel (%p144) target = $region32
        $region31: #{tpu_custom_call.1} parent=27 // pred_region
          %147 = dma.done [#allocation5], 16
        $region32: #{tpu_custom_call.1} parent=27 // pred_fallthru
          _
        %s148 = sand.u32 %s49, 1
        %s149 = scalar_lea.sflag [#allocation3], %s148
        %s150 = sand.u32 %s49, 1
        %s151 = smul.addr %s150, 32
        %s152 = scalar_lea.vmem [#allocation6], %s151
        // Predicated region
        $region33: #{tpu_custom_call.1} parent=27 // pred_check
          %p153 = pneg %p62
        $region34: #{tpu_custom_call.1} parent=27 // pred_check_branch
          %155 = sbr.rel (%p153) target = $region36
        $region35: #{tpu_custom_call.1} parent=27 // pred_region
          %156 = dma.done %s149, 512
        $region36: #{tpu_custom_call.1} parent=27 // pred_fallthru
          _
        %157 = sfence
        %p158 = pneg %p36
        %p159 = pneg %p33
        %s160 = sand.u32 %s49, 1
        %s161 = scalar_lea.sflag [#allocation3], %s160
        %s162 = sand.u32 %s49, 1
        %s163 = smul.addr %s162, 32
        %s164 = scalar_lea.vmem [#allocation6], %s163
        %p165 = pneg %p62
        %p166 = pneg %p59
        %p167 = pneg %p88
        %p168 = pneg %p85
        %s169 = sand.u32 %s75, 1
        %s170 = scalar_lea.sflag [#allocation4], %s169
        %s171 = sand.u32 %s75, 1
        %s172 = smul.addr %s171, 32
        %s173 = scalar_lea.vmem [#allocation7], %s172
        %s174 = smul.u32 4, %s20
        %s175 = smul.u32 4, %s20
        %s176 = sld [smem:[#allocation2]]
        %s177 = sld [smem:[#allocation2 + $0x1]]
        %s178 = sld [smem:[#allocation2 + $0x2]]
        %s179 = sld [smem:[#allocation2 + $0x3]]
        %s180 = sld [smem:[#allocation2 + $0x4]]
        %s181 = sld [smem:[#allocation2 + $0x5]]
        %s182 = sld [smem:[#allocation2 + $0x6]]
        %s183 = sld [smem:[#allocation2 + $0x7]]
        %s184 = sld [smem:[#allocation2 + $0x8]]
        %s185 = sld [smem:[#allocation2 + $0x9]]
        %s186 = sld [smem:[#allocation2 + $0xa]]
        %s187 = sld [smem:[#allocation2 + $0xb]]
        %s188 = sld [smem:[#allocation2 + $0xc]]
        %s189 = sld [smem:[#allocation2 + $0xd]]
        %s190 = sld [smem:[#allocation2 + $0xe]]
        %s191 = sld [smem:[#allocation2 + $0xf]]
        %s192 = sld [smem:[#allocation2 + $0x10]]
        %s193 = sld [smem:[#allocation2 + $0x11]]
        %s194 = sld [smem:[#allocation2 + $0x12]]
        %s195 = sld [smem:[#allocation2 + $0x13]]
        %s196 = sld [smem:[#allocation2 + $0x14]]
        %s197 = sld [smem:[#allocation2 + $0x15]]
        %s198 = sld [smem:[#allocation2 + $0x16]]
        %s199 = sld [smem:[#allocation2 + $0x17]]
        %s200 = sld [smem:[#allocation2 + $0x18]]
        %s201 = sld [smem:[#allocation2 + $0x19]]
        %s202 = sld [smem:[#allocation2 + $0x1a]]
        %s203 = sld [smem:[#allocation2 + $0x1b]]
        %s204 = sld [smem:[#allocation2 + $0x1c]]
        %s205 = sld [smem:[#allocation2 + $0x1d]]
        %s206 = sld [smem:[#allocation2 + $0x1e]]
        %s207 = sld [smem:[#allocation2 + $0x1f]]
        %s208 = sld [smem:[#allocation2 + $0x20]]
        %s209 = sld [smem:[#allocation2 + $0x21]]
        %s210 = sld [smem:[#allocation2 + $0x22]]
        %s211 = sld [smem:[#allocation2 + $0x23]]
        %s212 = sld [smem:[#allocation2 + $0x24]]
        %s213 = sld [smem:[#allocation2 + $0x25]]
        %s214 = sld [smem:[#allocation2 + $0x26]]
        %s215 = sld [smem:[#allocation2 + $0x27]]
        %s216 = sld [smem:[#allocation2 + $0x28]]
        %s217 = sld [smem:[#allocation2 + $0x29]]
        %s218 = sld [smem:[#allocation2 + $0x2a]]
        %s219 = sld [smem:[#allocation2 + $0x2b]]
        %s220 = sld [smem:[#allocation2 + $0x2c]]
        %s221 = sld [smem:[#allocation2 + $0x2d]]
        %s222 = sld [smem:[#allocation2 + $0x2e]]
        %s223 = sld [smem:[#allocation2 + $0x2f]]
        %s224 = sld [smem:[#allocation2 + $0x30]]
        %s225 = sld [smem:[#allocation2 + $0x31]]
        %s226 = sld [smem:[#allocation2 + $0x32]]
        %s227 = sld [smem:[#allocation2 + $0x33]]
        %s228 = sld [smem:[#allocation2 + $0x34]]
        %s229 = sld [smem:[#allocation2 + $0x35]]
        %s230 = sld [smem:[#allocation2 + $0x36]]
        %s231 = sld [smem:[#allocation2 + $0x37]]
        %s232 = sld [smem:[#allocation2 + $0x38]]
        %s233 = sld [smem:[#allocation2 + $0x39]]
        %s234 = sld [smem:[#allocation2 + $0x3a]]
        %s235 = sld [smem:[#allocation2 + $0x3b]]
        %s236 = sld [smem:[#allocation2 + $0x3c]]
        %s237 = sld [smem:[#allocation2 + $0x3d]]
        %s238 = sld [smem:[#allocation2 + $0x3e]]
        %s239 = sld [smem:[#allocation2 + $0x3f]]
        %s240 = sld [smem:[#allocation2 + $0x40]]
        %s241 = sld [smem:[#allocation2 + $0x41]]
        %s242 = sld [smem:[#allocation2 + $0x42]]
        %s243 = sld [smem:[#allocation2 + $0x43]]
        %s244 = sld [smem:[#allocation2 + $0x44]]
        %s245 = sld [smem:[#allocation2 + $0x45]]
        %s246 = sld [smem:[#allocation2 + $0x46]]
        %s247 = sld [smem:[#allocation2 + $0x47]]
        %s248 = sld [smem:[#allocation2 + $0x48]]
        %s249 = sld [smem:[#allocation2 + $0x49]]
        %s250 = sld [smem:[#allocation2 + $0x4a]]
        %s251 = sld [smem:[#allocation2 + $0x4b]]
        %s252 = sld [smem:[#allocation2 + $0x4c]]
        %s253 = sld [smem:[#allocation2 + $0x4d]]
        %s254 = sld [smem:[#allocation2 + $0x4e]]
        %s255 = sld [smem:[#allocation2 + $0x4f]]
        %v256 = vld [vmem:[%s152] sm:$0xff]
        %v257 = vld [vmem:[%s152 + $0x8] sm:$0xff]
        %v258 = vld [vmem:[%s152 + $0x10] sm:$0xff]
        %v259 = vld [vmem:[%s152 + $0x18] sm:$0xff]
        %v260 = vstv %s176
        %v261 = vmul.f32 %v256, %v260
        %v262 = vmul.f32 %v257, %v260
        %v263 = vmul.f32 %v258, %v260
        %v264 = vmul.f32 %v259, %v260
        %v265 = vstv %s186
        %v266 = vadd.f32 %v261, %v265
        %v267 = vadd.f32 %v262, %v265
        %v268 = vadd.f32 %v263, %v265
        %v269 = vadd.f32 %v264, %v265
        %v270 = vmax.f32 %v266, 0.0
        %v271 = vmax.f32 %v267, 0.0
        %v272 = vmax.f32 %v268, 0.0
        %v273 = vmax.f32 %v269, 0.0
        %v274 = vstv %s196
        %v275 = vmul.f32 %v270, %v274
        %v276 = vmul.f32 %v271, %v274
        %v277 = vmul.f32 %v272, %v274
        %v278 = vmul.f32 %v273, %v274
        %v279 = vstv %s246
        %v280 = vadd.f32 %v275, %v279
        %v281 = vadd.f32 %v276, %v279
        %v282 = vadd.f32 %v277, %v279
        %v283 = vadd.f32 %v278, %v279
        %v284 = vstv %s197
        %v285 = vmul.f32 %v270, %v284
        %v286 = vmul.f32 %v271, %v284
        %v287 = vmul.f32 %v272, %v284
        %v288 = vmul.f32 %v273, %v284
        %v289 = vstv %s247
        %v290 = vadd.f32 %v285, %v289
        %v291 = vadd.f32 %v286, %v289
        %v292 = vadd.f32 %v287, %v289
        %v293 = vadd.f32 %v288, %v289
        %v294 = vstv %s198
        %v295 = vmul.f32 %v270, %v294
        %v296 = vmul.f32 %v271, %v294
        %v297 = vmul.f32 %v272, %v294
        %v298 = vmul.f32 %v273, %v294
        %v299 = vstv %s248
        %v300 = vadd.f32 %v295, %v299
        %v301 = vadd.f32 %v296, %v299
        %v302 = vadd.f32 %v297, %v299
        %v303 = vadd.f32 %v298, %v299
        %v304 = vstv %s199
        %v305 = vmul.f32 %v270, %v304
        %v306 = vmul.f32 %v271, %v304
        %v307 = vmul.f32 %v272, %v304
        %v308 = vmul.f32 %v273, %v304
        %v309 = vstv %s249
        %v310 = vadd.f32 %v305, %v309
        %v311 = vadd.f32 %v306, %v309
        %v312 = vadd.f32 %v307, %v309
        %v313 = vadd.f32 %v308, %v309
        %v314 = vstv %s200
        %v315 = vmul.f32 %v270, %v314
        %v316 = vmul.f32 %v271, %v314
        %v317 = vmul.f32 %v272, %v314
        %v318 = vmul.f32 %v273, %v314
        %v319 = vstv %s250
        %v320 = vadd.f32 %v315, %v319
        %v321 = vadd.f32 %v316, %v319
        %v322 = vadd.f32 %v317, %v319
        %v323 = vadd.f32 %v318, %v319
        %v324 = vstv %s177
        %v325 = vmul.f32 %v256, %v324
        %v326 = vmul.f32 %v257, %v324
        %v327 = vmul.f32 %v258, %v324
        %v328 = vmul.f32 %v259, %v324
        %v329 = vstv %s187
        %v330 = vadd.f32 %v325, %v329
        %v331 = vadd.f32 %v326, %v329
        %v332 = vadd.f32 %v327, %v329
        %v333 = vadd.f32 %v328, %v329
        %v334 = vmax.f32 %v330, 0.0
        %v335 = vmax.f32 %v331, 0.0
        %v336 = vmax.f32 %v332, 0.0
        %v337 = vmax.f32 %v333, 0.0
        %v338 = vstv %s201
        %v339 = vmul.f32 %v334, %v338
        %v340 = vmul.f32 %v335, %v338
        %v341 = vmul.f32 %v336, %v338
        %v342 = vmul.f32 %v337, %v338
        %v343 = vadd.f32 %v280, %v339
        %v344 = vadd.f32 %v281, %v340
        %v345 = vadd.f32 %v282, %v341
        %v346 = vadd.f32 %v283, %v342
        %v347 = vstv %s202
        %v348 = vmul.f32 %v334, %v347
        %v349 = vmul.f32 %v335, %v347
        %v350 = vmul.f32 %v336, %v347
        %v351 = vmul.f32 %v337, %v347
        %v352 = vadd.f32 %v290, %v348
        %v353 = vadd.f32 %v291, %v349
        %v354 = vadd.f32 %v292, %v350
        %v355 = vadd.f32 %v293, %v351
        %v356 = vstv %s203
        %v357 = vmul.f32 %v334, %v356
        %v358 = vmul.f32 %v335, %v356
        %v359 = vmul.f32 %v336, %v356
        %v360 = vmul.f32 %v337, %v356
        %v361 = vadd.f32 %v300, %v357
        %v362 = vadd.f32 %v301, %v358
        %v363 = vadd.f32 %v302, %v359
        %v364 = vadd.f32 %v303, %v360
        %v365 = vstv %s204
        %v366 = vmul.f32 %v334, %v365
        %v367 = vmul.f32 %v335, %v365
        %v368 = vmul.f32 %v336, %v365
        %v369 = vmul.f32 %v337, %v365
        %v370 = vadd.f32 %v310, %v366
        %v371 = vadd.f32 %v311, %v367
        %v372 = vadd.f32 %v312, %v368
        %v373 = vadd.f32 %v313, %v369
        %v374 = vstv %s205
        %v375 = vmul.f32 %v334, %v374
        %v376 = vmul.f32 %v335, %v374
        %v377 = vmul.f32 %v336, %v374
        %v378 = vmul.f32 %v337, %v374
        %v379 = vadd.f32 %v320, %v375
        %v380 = vadd.f32 %v321, %v376
        %v381 = vadd.f32 %v322, %v377
        %v382 = vadd.f32 %v323, %v378
        %v383 = vstv %s178
        %v384 = vmul.f32 %v256, %v383
        %v385 = vmul.f32 %v257, %v383
        %v386 = vmul.f32 %v258, %v383
        %v387 = vmul.f32 %v259, %v383
        %v388 = vstv %s188
        %v389 = vadd.f32 %v384, %v388
        %v390 = vadd.f32 %v385, %v388
        %v391 = vadd.f32 %v386, %v388
        %v392 = vadd.f32 %v387, %v388
        %v393 = vmax.f32 %v389, 0.0
        %v394 = vmax.f32 %v390, 0.0
        %v395 = vmax.f32 %v391, 0.0
        %v396 = vmax.f32 %v392, 0.0
        %v397 = vstv %s206
        %v398 = vmul.f32 %v393, %v397
        %v399 = vmul.f32 %v394, %v397
        %v400 = vmul.f32 %v395, %v397
        %v401 = vmul.f32 %v396, %v397
        %v402 = vadd.f32 %v343, %v398
        %v403 = vadd.f32 %v344, %v399
        %v404 = vadd.f32 %v345, %v400
        %v405 = vadd.f32 %v346, %v401
        %v406 = vstv %s207
        %v407 = vmul.f32 %v393, %v406
        %v408 = vmul.f32 %v394, %v406
        %v409 = vmul.f32 %v395, %v406
        %v410 = vmul.f32 %v396, %v406
        %v411 = vadd.f32 %v352, %v407
        %v412 = vadd.f32 %v353, %v408
        %v413 = vadd.f32 %v354, %v409
        %v414 = vadd.f32 %v355, %v410
        %v415 = vstv %s208
        %v416 = vmul.f32 %v393, %v415
        %v417 = vmul.f32 %v394, %v415
        %v418 = vmul.f32 %v395, %v415
        %v419 = vmul.f32 %v396, %v415
        %v420 = vadd.f32 %v361, %v416
        %v421 = vadd.f32 %v362, %v417
        %v422 = vadd.f32 %v363, %v418
        %v423 = vadd.f32 %v364, %v419
        %v424 = vstv %s209
        %v425 = vmul.f32 %v393, %v424
        %v426 = vmul.f32 %v394, %v424
        %v427 = vmul.f32 %v395, %v424
        %v428 = vmul.f32 %v396, %v424
        %v429 = vadd.f32 %v370, %v425
        %v430 = vadd.f32 %v371, %v426
        %v431 = vadd.f32 %v372, %v427
        %v432 = vadd.f32 %v373, %v428
        %v433 = vstv %s210
        %v434 = vmul.f32 %v393, %v433
        %v435 = vmul.f32 %v394, %v433
        %v436 = vmul.f32 %v395, %v433
        %v437 = vmul.f32 %v396, %v433
        %v438 = vadd.f32 %v379, %v434
        %v439 = vadd.f32 %v380, %v435
        %v440 = vadd.f32 %v381, %v436
        %v441 = vadd.f32 %v382, %v437
        %v442 = vstv %s179
        %v443 = vmul.f32 %v256, %v442
        %v444 = vmul.f32 %v257, %v442
        %v445 = vmul.f32 %v258, %v442
        %v446 = vmul.f32 %v259, %v442
        %v447 = vstv %s189
        %v448 = vadd.f32 %v443, %v447
        %v449 = vadd.f32 %v444, %v447
        %v450 = vadd.f32 %v445, %v447
        %v451 = vadd.f32 %v446, %v447
        %v452 = vmax.f32 %v448, 0.0
        %v453 = vmax.f32 %v449, 0.0
        %v454 = vmax.f32 %v450, 0.0
        %v455 = vmax.f32 %v451, 0.0
        %v456 = vstv %s211
        %v457 = vmul.f32 %v452, %v456
        %v458 = vmul.f32 %v453, %v456
        %v459 = vmul.f32 %v454, %v456
        %v460 = vmul.f32 %v455, %v456
        %v461 = vadd.f32 %v402, %v457
        %v462 = vadd.f32 %v403, %v458
        %v463 = vadd.f32 %v404, %v459
        %v464 = vadd.f32 %v405, %v460
        %v465 = vstv %s212
        %v466 = vmul.f32 %v452, %v465
        %v467 = vmul.f32 %v453, %v465
        %v468 = vmul.f32 %v454, %v465
        %v469 = vmul.f32 %v455, %v465
        %v470 = vadd.f32 %v411, %v466
        %v471 = vadd.f32 %v412, %v467
        %v472 = vadd.f32 %v413, %v468
        %v473 = vadd.f32 %v414, %v469
        %v474 = vstv %s213
        %v475 = vmul.f32 %v452, %v474
        %v476 = vmul.f32 %v453, %v474
        %v477 = vmul.f32 %v454, %v474
        %v478 = vmul.f32 %v455, %v474
        %v479 = vadd.f32 %v420, %v475
        %v480 = vadd.f32 %v421, %v476
        %v481 = vadd.f32 %v422, %v477
        %v482 = vadd.f32 %v423, %v478
        %v483 = vstv %s214
        %v484 = vmul.f32 %v452, %v483
        %v485 = vmul.f32 %v453, %v483
        %v486 = vmul.f32 %v454, %v483
        %v487 = vmul.f32 %v455, %v483
        %v488 = vadd.f32 %v429, %v484
        %v489 = vadd.f32 %v430, %v485
        %v490 = vadd.f32 %v431, %v486
        %v491 = vadd.f32 %v432, %v487
        %v492 = vstv %s215
        %v493 = vmul.f32 %v452, %v492
        %v494 = vmul.f32 %v453, %v492
        %v495 = vmul.f32 %v454, %v492
        %v496 = vmul.f32 %v455, %v492
        %v497 = vadd.f32 %v438, %v493
        %v498 = vadd.f32 %v439, %v494
        %v499 = vadd.f32 %v440, %v495
        %v500 = vadd.f32 %v441, %v496
        %v501 = vstv %s180
        %v502 = vmul.f32 %v256, %v501
        %v503 = vmul.f32 %v257, %v501
        %v504 = vmul.f32 %v258, %v501
        %v505 = vmul.f32 %v259, %v501
        %v506 = vstv %s190
        %v507 = vadd.f32 %v502, %v506
        %v508 = vadd.f32 %v503, %v506
        %v509 = vadd.f32 %v504, %v506
        %v510 = vadd.f32 %v505, %v506
        %v511 = vmax.f32 %v507, 0.0
        %v512 = vmax.f32 %v508, 0.0
        %v513 = vmax.f32 %v509, 0.0
        %v514 = vmax.f32 %v510, 0.0
        %v515 = vstv %s216
        %v516 = vmul.f32 %v511, %v515
        %v517 = vmul.f32 %v512, %v515
        %v518 = vmul.f32 %v513, %v515
        %v519 = vmul.f32 %v514, %v515
        %v520 = vadd.f32 %v461, %v516
        %v521 = vadd.f32 %v462, %v517
        %v522 = vadd.f32 %v463, %v518
        %v523 = vadd.f32 %v464, %v519
        %v524 = vstv %s217
        %v525 = vmul.f32 %v511, %v524
        %v526 = vmul.f32 %v512, %v524
        %v527 = vmul.f32 %v513, %v524
        %v528 = vmul.f32 %v514, %v524
        %v529 = vadd.f32 %v470, %v525
        %v530 = vadd.f32 %v471, %v526
        %v531 = vadd.f32 %v472, %v527
        %v532 = vadd.f32 %v473, %v528
        %v533 = vstv %s218
        %v534 = vmul.f32 %v511, %v533
        %v535 = vmul.f32 %v512, %v533
        %v536 = vmul.f32 %v513, %v533
        %v537 = vmul.f32 %v514, %v533
        %v538 = vadd.f32 %v479, %v534
        %v539 = vadd.f32 %v480, %v535
        %v540 = vadd.f32 %v481, %v536
        %v541 = vadd.f32 %v482, %v537
        %v542 = vstv %s219
        %v543 = vmul.f32 %v511, %v542
        %v544 = vmul.f32 %v512, %v542
        %v545 = vmul.f32 %v513, %v542
        %v546 = vmul.f32 %v514, %v542
        %v547 = vadd.f32 %v488, %v543
        %v548 = vadd.f32 %v489, %v544
        %v549 = vadd.f32 %v490, %v545
        %v550 = vadd.f32 %v491, %v546
        %v551 = vstv %s220
        %v552 = vmul.f32 %v511, %v551
        %v553 = vmul.f32 %v512, %v551
        %v554 = vmul.f32 %v513, %v551
        %v555 = vmul.f32 %v514, %v551
        %v556 = vadd.f32 %v497, %v552
        %v557 = vadd.f32 %v498, %v553
        %v558 = vadd.f32 %v499, %v554
        %v559 = vadd.f32 %v500, %v555
        %v560 = vstv %s181
        %v561 = vmul.f32 %v256, %v560
        %v562 = vmul.f32 %v257, %v560
        %v563 = vmul.f32 %v258, %v560
        %v564 = vmul.f32 %v259, %v560
        %v565 = vstv %s191
        %v566 = vadd.f32 %v561, %v565
        %v567 = vadd.f32 %v562, %v565
        %v568 = vadd.f32 %v563, %v565
        %v569 = vadd.f32 %v564, %v565
        %v570 = vmax.f32 %v566, 0.0
        %v571 = vmax.f32 %v567, 0.0
        %v572 = vmax.f32 %v568, 0.0
        %v573 = vmax.f32 %v569, 0.0
        %v574 = vstv %s221
        %v575 = vmul.f32 %v570, %v574
        %v576 = vmul.f32 %v571, %v574
        %v577 = vmul.f32 %v572, %v574
        %v578 = vmul.f32 %v573, %v574
        %v579 = vadd.f32 %v520, %v575
        %v580 = vadd.f32 %v521, %v576
        %v581 = vadd.f32 %v522, %v577
        %v582 = vadd.f32 %v523, %v578
        %v583 = vstv %s222
        %v584 = vmul.f32 %v570, %v583
        %v585 = vmul.f32 %v571, %v583
        %v586 = vmul.f32 %v572, %v583
        %v587 = vmul.f32 %v573, %v583
        %v588 = vadd.f32 %v529, %v584
        %v589 = vadd.f32 %v530, %v585
        %v590 = vadd.f32 %v531, %v586
        %v591 = vadd.f32 %v532, %v587
        %v592 = vstv %s223
        %v593 = vmul.f32 %v570, %v592
        %v594 = vmul.f32 %v571, %v592
        %v595 = vmul.f32 %v572, %v592
        %v596 = vmul.f32 %v573, %v592
        %v597 = vadd.f32 %v538, %v593
        %v598 = vadd.f32 %v539, %v594
        %v599 = vadd.f32 %v540, %v595
        %v600 = vadd.f32 %v541, %v596
        %v601 = vstv %s224
        %v602 = vmul.f32 %v570, %v601
        %v603 = vmul.f32 %v571, %v601
        %v604 = vmul.f32 %v572, %v601
        %v605 = vmul.f32 %v573, %v601
        %v606 = vadd.f32 %v547, %v602
        %v607 = vadd.f32 %v548, %v603
        %v608 = vadd.f32 %v549, %v604
        %v609 = vadd.f32 %v550, %v605
        %v610 = vstv %s225
        %v611 = vmul.f32 %v570, %v610
        %v612 = vmul.f32 %v571, %v610
        %v613 = vmul.f32 %v572, %v610
        %v614 = vmul.f32 %v573, %v610
        %v615 = vadd.f32 %v556, %v611
        %v616 = vadd.f32 %v557, %v612
        %v617 = vadd.f32 %v558, %v613
        %v618 = vadd.f32 %v559, %v614
        %v619 = vstv %s182
        %v620 = vmul.f32 %v256, %v619
        %v621 = vmul.f32 %v257, %v619
        %v622 = vmul.f32 %v258, %v619
        %v623 = vmul.f32 %v259, %v619
        %v624 = vstv %s192
        %v625 = vadd.f32 %v620, %v624
        %v626 = vadd.f32 %v621, %v624
        %v627 = vadd.f32 %v622, %v624
        %v628 = vadd.f32 %v623, %v624
        %v629 = vmax.f32 %v625, 0.0
        %v630 = vmax.f32 %v626, 0.0
        %v631 = vmax.f32 %v627, 0.0
        %v632 = vmax.f32 %v628, 0.0
        %v633 = vstv %s226
        %v634 = vmul.f32 %v629, %v633
        %v635 = vmul.f32 %v630, %v633
        %v636 = vmul.f32 %v631, %v633
        %v637 = vmul.f32 %v632, %v633
        %v638 = vadd.f32 %v579, %v634
        %v639 = vadd.f32 %v580, %v635
        %v640 = vadd.f32 %v581, %v636
        %v641 = vadd.f32 %v582, %v637
        %v642 = vstv %s227
        %v643 = vmul.f32 %v629, %v642
        %v644 = vmul.f32 %v630, %v642
        %v645 = vmul.f32 %v631, %v642
        %v646 = vmul.f32 %v632, %v642
        %v647 = vadd.f32 %v588, %v643
        %v648 = vadd.f32 %v589, %v644
        %v649 = vadd.f32 %v590, %v645
        %v650 = vadd.f32 %v591, %v646
        %v651 = vstv %s228
        %v652 = vmul.f32 %v629, %v651
        %v653 = vmul.f32 %v630, %v651
        %v654 = vmul.f32 %v631, %v651
        %v655 = vmul.f32 %v632, %v651
        %v656 = vadd.f32 %v597, %v652
        %v657 = vadd.f32 %v598, %v653
        %v658 = vadd.f32 %v599, %v654
        %v659 = vadd.f32 %v600, %v655
        %v660 = vstv %s229
        %v661 = vmul.f32 %v629, %v660
        %v662 = vmul.f32 %v630, %v660
        %v663 = vmul.f32 %v631, %v660
        %v664 = vmul.f32 %v632, %v660
        %v665 = vadd.f32 %v606, %v661
        %v666 = vadd.f32 %v607, %v662
        %v667 = vadd.f32 %v608, %v663
        %v668 = vadd.f32 %v609, %v664
        %v669 = vstv %s230
        %v670 = vmul.f32 %v629, %v669
        %v671 = vmul.f32 %v630, %v669
        %v672 = vmul.f32 %v631, %v669
        %v673 = vmul.f32 %v632, %v669
        %v674 = vadd.f32 %v615, %v670
        %v675 = vadd.f32 %v616, %v671
        %v676 = vadd.f32 %v617, %v672
        %v677 = vadd.f32 %v618, %v673
        %v678 = vstv %s183
        %v679 = vmul.f32 %v256, %v678
        %v680 = vmul.f32 %v257, %v678
        %v681 = vmul.f32 %v258, %v678
        %v682 = vmul.f32 %v259, %v678
        %v683 = vstv %s193
        %v684 = vadd.f32 %v679, %v683
        %v685 = vadd.f32 %v680, %v683
        %v686 = vadd.f32 %v681, %v683
        %v687 = vadd.f32 %v682, %v683
        %v688 = vmax.f32 %v684, 0.0
        %v689 = vmax.f32 %v685, 0.0
        %v690 = vmax.f32 %v686, 0.0
        %v691 = vmax.f32 %v687, 0.0
        %v692 = vstv %s231
        %v693 = vmul.f32 %v688, %v692
        %v694 = vmul.f32 %v689, %v692
        %v695 = vmul.f32 %v690, %v692
        %v696 = vmul.f32 %v691, %v692
        %v697 = vadd.f32 %v638, %v693
        %v698 = vadd.f32 %v639, %v694
        %v699 = vadd.f32 %v640, %v695
        %v700 = vadd.f32 %v641, %v696
        %v701 = vstv %s232
        %v702 = vmul.f32 %v688, %v701
        %v703 = vmul.f32 %v689, %v701
        %v704 = vmul.f32 %v690, %v701
        %v705 = vmul.f32 %v691, %v701
        %v706 = vadd.f32 %v647, %v702
        %v707 = vadd.f32 %v648, %v703
        %v708 = vadd.f32 %v649, %v704
        %v709 = vadd.f32 %v650, %v705
        %v710 = vstv %s233
        %v711 = vmul.f32 %v688, %v710
        %v712 = vmul.f32 %v689, %v710
        %v713 = vmul.f32 %v690, %v710
        %v714 = vmul.f32 %v691, %v710
        %v715 = vadd.f32 %v656, %v711
        %v716 = vadd.f32 %v657, %v712
        %v717 = vadd.f32 %v658, %v713
        %v718 = vadd.f32 %v659, %v714
        %v719 = vstv %s234
        %v720 = vmul.f32 %v688, %v719
        %v721 = vmul.f32 %v689, %v719
        %v722 = vmul.f32 %v690, %v719
        %v723 = vmul.f32 %v691, %v719
        %v724 = vadd.f32 %v665, %v720
        %v725 = vadd.f32 %v666, %v721
        %v726 = vadd.f32 %v667, %v722
        %v727 = vadd.f32 %v668, %v723
        %v728 = vstv %s235
        %v729 = vmul.f32 %v688, %v728
        %v730 = vmul.f32 %v689, %v728
        %v731 = vmul.f32 %v690, %v728
        %v732 = vmul.f32 %v691, %v728
        %v733 = vadd.f32 %v674, %v729
        %v734 = vadd.f32 %v675, %v730
        %v735 = vadd.f32 %v676, %v731
        %v736 = vadd.f32 %v677, %v732
        %v737 = vstv %s184
        %v738 = vmul.f32 %v256, %v737
        %v739 = vmul.f32 %v257, %v737
        %v740 = vmul.f32 %v258, %v737
        %v741 = vmul.f32 %v259, %v737
        %v742 = vstv %s194
        %v743 = vadd.f32 %v738, %v742
        %v744 = vadd.f32 %v739, %v742
        %v745 = vadd.f32 %v740, %v742
        %v746 = vadd.f32 %v741, %v742
        %v747 = vmax.f32 %v743, 0.0
        %v748 = vmax.f32 %v744, 0.0
        %v749 = vmax.f32 %v745, 0.0
        %v750 = vmax.f32 %v746, 0.0
        %v751 = vstv %s236
        %v752 = vmul.f32 %v747, %v751
        %v753 = vmul.f32 %v748, %v751
        %v754 = vmul.f32 %v749, %v751
        %v755 = vmul.f32 %v750, %v751
        %v756 = vadd.f32 %v697, %v752
        %v757 = vadd.f32 %v698, %v753
        %v758 = vadd.f32 %v699, %v754
        %v759 = vadd.f32 %v700, %v755
        %v760 = vstv %s237
        %v761 = vmul.f32 %v747, %v760
        %v762 = vmul.f32 %v748, %v760
        %v763 = vmul.f32 %v749, %v760
        %v764 = vmul.f32 %v750, %v760
        %v765 = vadd.f32 %v706, %v761
        %v766 = vadd.f32 %v707, %v762
        %v767 = vadd.f32 %v708, %v763
        %v768 = vadd.f32 %v709, %v764
        %v769 = vstv %s238
        %v770 = vmul.f32 %v747, %v769
        %v771 = vmul.f32 %v748, %v769
        %v772 = vmul.f32 %v749, %v769
        %v773 = vmul.f32 %v750, %v769
        %v774 = vadd.f32 %v715, %v770
        %v775 = vadd.f32 %v716, %v771
        %v776 = vadd.f32 %v717, %v772
        %v777 = vadd.f32 %v718, %v773
        %v778 = vstv %s239
        %v779 = vmul.f32 %v747, %v778
        %v780 = vmul.f32 %v748, %v778
        %v781 = vmul.f32 %v749, %v778
        %v782 = vmul.f32 %v750, %v778
        %v783 = vadd.f32 %v724, %v779
        %v784 = vadd.f32 %v725, %v780
        %v785 = vadd.f32 %v726, %v781
        %v786 = vadd.f32 %v727, %v782
        %v787 = vstv %s240
        %v788 = vmul.f32 %v747, %v787
        %v789 = vmul.f32 %v748, %v787
        %v790 = vmul.f32 %v749, %v787
        %v791 = vmul.f32 %v750, %v787
        %v792 = vadd.f32 %v733, %v788
        %v793 = vadd.f32 %v734, %v789
        %v794 = vadd.f32 %v735, %v790
        %v795 = vadd.f32 %v736, %v791
        %v796 = vstv %s185
        %v797 = vmul.f32 %v256, %v796
        %v798 = vmul.f32 %v257, %v796
        %v799 = vmul.f32 %v258, %v796
        %v800 = vmul.f32 %v259, %v796
        %v801 = vstv %s195
        %v802 = vadd.f32 %v797, %v801
        %v803 = vadd.f32 %v798, %v801
        %v804 = vadd.f32 %v799, %v801
        %v805 = vadd.f32 %v800, %v801
        %v806 = vmax.f32 %v802, 0.0
        %v807 = vmax.f32 %v803, 0.0
        %v808 = vmax.f32 %v804, 0.0
        %v809 = vmax.f32 %v805, 0.0
        %v810 = vstv %s241
        %v811 = vmul.f32 %v806, %v810
        %v812 = vmul.f32 %v807, %v810
        %v813 = vmul.f32 %v808, %v810
        %v814 = vmul.f32 %v809, %v810
        %v815 = vadd.f32 %v756, %v811
        %v816 = vadd.f32 %v757, %v812
        %v817 = vadd.f32 %v758, %v813
        %v818 = vadd.f32 %v759, %v814
        %v819 = vstv %s242
        %v820 = vmul.f32 %v806, %v819
        %v821 = vmul.f32 %v807, %v819
        %v822 = vmul.f32 %v808, %v819
        %v823 = vmul.f32 %v809, %v819
        %v824 = vadd.f32 %v765, %v820
        %v825 = vadd.f32 %v766, %v821
        %v826 = vadd.f32 %v767, %v822
        %v827 = vadd.f32 %v768, %v823
        %v828 = vstv %s243
        %v829 = vmul.f32 %v806, %v828
        %v830 = vmul.f32 %v807, %v828
        %v831 = vmul.f32 %v808, %v828
        %v832 = vmul.f32 %v809, %v828
        %v833 = vadd.f32 %v774, %v829
        %v834 = vadd.f32 %v775, %v830
        %v835 = vadd.f32 %v776, %v831
        %v836 = vadd.f32 %v777, %v832
        %v837 = vstv %s244
        %v838 = vmul.f32 %v806, %v837
        %v839 = vmul.f32 %v807, %v837
        %v840 = vmul.f32 %v808, %v837
        %v841 = vmul.f32 %v809, %v837
        %v842 = vadd.f32 %v783, %v838
        %v843 = vadd.f32 %v784, %v839
        %v844 = vadd.f32 %v785, %v840
        %v845 = vadd.f32 %v786, %v841
        %v846 = vstv %s245
        %v847 = vmul.f32 %v806, %v846
        %v848 = vmul.f32 %v807, %v846
        %v849 = vmul.f32 %v808, %v846
        %v850 = vmul.f32 %v809, %v846
        %v851 = vadd.f32 %v792, %v847
        %v852 = vadd.f32 %v793, %v848
        %v853 = vadd.f32 %v794, %v849
        %v854 = vadd.f32 %v795, %v850
        %v855 = vmax.f32 %v815, 0.0
        %v856 = vmax.f32 %v816, 0.0
        %v857 = vmax.f32 %v817, 0.0
        %v858 = vmax.f32 %v818, 0.0
        %v859 = vstv %s251
        %v860 = vmul.f32 %v855, %v859
        %v861 = vmul.f32 %v856, %v859
        %v862 = vmul.f32 %v857, %v859
        %v863 = vmul.f32 %v858, %v859
        %v864 = vmax.f32 %v824, 0.0
        %v865 = vmax.f32 %v825, 0.0
        %v866 = vmax.f32 %v826, 0.0
        %v867 = vmax.f32 %v827, 0.0
        %v868 = vstv %s252
        %v869 = vmul.f32 %v864, %v868
        %v870 = vmul.f32 %v865, %v868
        %v871 = vmul.f32 %v866, %v868
        %v872 = vmul.f32 %v867, %v868
        %v873 = vadd.f32 %v860, %v869
        %v874 = vadd.f32 %v861, %v870
        %v875 = vadd.f32 %v862, %v871
        %v876 = vadd.f32 %v863, %v872
        %v877 = vmax.f32 %v833, 0.0
        %v878 = vmax.f32 %v834, 0.0
        %v879 = vmax.f32 %v835, 0.0
        %v880 = vmax.f32 %v836, 0.0
        %v881 = vstv %s253
        %v882 = vmul.f32 %v877, %v881
        %v883 = vmul.f32 %v878, %v881
        %v884 = vmul.f32 %v879, %v881
        %v885 = vmul.f32 %v880, %v881
        %v886 = vadd.f32 %v873, %v882
        %v887 = vadd.f32 %v874, %v883
        %v888 = vadd.f32 %v875, %v884
        %v889 = vadd.f32 %v876, %v885
        %v890 = vmax.f32 %v842, 0.0
        %v891 = vmax.f32 %v843, 0.0
        %v892 = vmax.f32 %v844, 0.0
        %v893 = vmax.f32 %v845, 0.0
        %v894 = vstv %s254
        %v895 = vmul.f32 %v890, %v894
        %v896 = vmul.f32 %v891, %v894
        %v897 = vmul.f32 %v892, %v894
        %v898 = vmul.f32 %v893, %v894
        %v899 = vadd.f32 %v886, %v895
        %v900 = vadd.f32 %v887, %v896
        %v901 = vadd.f32 %v888, %v897
        %v902 = vadd.f32 %v889, %v898
        %v903 = vmax.f32 %v851, 0.0
        %v904 = vmax.f32 %v852, 0.0
        %v905 = vmax.f32 %v853, 0.0
        %v906 = vmax.f32 %v854, 0.0
        %v907 = vstv %s255
        %v908 = vmul.f32 %v903, %v907
        %v909 = vmul.f32 %v904, %v907
        %v910 = vmul.f32 %v905, %v907
        %v911 = vmul.f32 %v906, %v907
        %v912 = vadd.f32 %v899, %v908
        %v913 = vadd.f32 %v900, %v909
        %v914 = vadd.f32 %v901, %v910
        %v915 = vadd.f32 %v902, %v911
        %916 = vst [vmem:[%s173] sm:$0xff] %v912
        %917 = vst [vmem:[%s173 + $0x8] sm:$0xff] %v913
        %918 = vst [vmem:[%s173 + $0x10] sm:$0xff] %v914
        %919 = vst [vmem:[%s173 + $0x18] sm:$0xff] %v915
        %s920 = sand.u32 %s75, 1
        %s921 = scalar_lea.sflag [#allocation4], %s920
        %s922 = sand.u32 %s75, 1
        %s923 = smul.addr %s922, 32
        %s924 = scalar_lea.vmem [#allocation7], %s923
        // Predicated region
        $region37: #{tpu_custom_call.1} parent=27 // pred_check
          %p925 = pneg %p85
        $region38: #{tpu_custom_call.1} parent=27 // pred_check_branch
          %927 = sbr.rel (%p925) target = $region40
        $region39: #{tpu_custom_call.1} parent=27 // pred_region
          %s928 = smul.u32 4, %s20
          %s930 = ssub.s32 512, 512
          %931 = vsyncadd %s921, %s930
          %s932 = smul.addr %s928, 128
          %s933 = scalar_lea.hbm %s2, %s932
          %s934 = sshll.u32 %s924, 4
          %s935 = int_to_ptr.vmem [resolvable:$true] %s934
          %940 = dma.vmem_to_hbm [thread:$0]  %s935, 512, %s933, %s921, 128, 128, 8
        $region40: #{tpu_custom_call.1} parent=27 // pred_fallthru
          _
      $region28: #{tpu_custom_call.1} parent=5 // pred_fallthru
        _
      %p941 = scmp.le.s32.totalorder 2, %s15
      // Predicated region
      $region41: #{tpu_custom_call.1} parent=5 // pred_check
        %p942 = pneg %p941
      $region42: #{tpu_custom_call.1} parent=5 // pred_check_branch
        %944 = sbr.rel (%p942) target = $region44
      $region43: #{tpu_custom_call.1} parent=5 // pred_region
        %s945 = ssub.s32 %s15, 2
        // Predicated region
        $region45: #{tpu_custom_call.1} parent=43 // pred_check
          %p946 = pneg %p91
        $region46: #{tpu_custom_call.1} parent=43 // pred_check_branch
          %948 = sbr.rel (%p946) target = $region48
        $region47: #{tpu_custom_call.1} parent=43 // pred_region
          %s949 = sand.u32 %s76, 1
          %s950 = scalar_lea.sflag [#allocation4], %s949
          %s951 = sand.u32 %s76, 1
          %s952 = smul.addr %s951, 32
          %s953 = scalar_lea.vmem [#allocation7], %s952
          %954 = dma.done %s950, 512
        $region48: #{tpu_custom_call.1} parent=43 // pred_fallthru
          _
      $region44: #{tpu_custom_call.1} parent=5 // pred_fallthru
        _
    $region6: #{tpu_custom_call.1} parent=1 // loop_footer
      %s19 = sadd.s32 1, %s15
    $region7: #{tpu_custom_call.1} parent=1 // loop_footer_branch
      %14 = sbr.rel target = $region3
    $region8: #{tpu_custom_call.1} parent=1 // loop_exit
      _
    %955 = vsyncpa [#allocation3], 1
    %s956 = scalar_lea.sflag [#allocation3], 1
    %957 = vsyncpa %s956, 1
    %958 = vsyncpa [#allocation4], 1
    %s959 = scalar_lea.sflag [#allocation4], 1
    %960 = vsyncpa %s959, 1
    %961 = vsyncpa [#allocation5], 1
    %s962 = scalar_lea.sflag [#allocation5], 1
    %963 = vsyncpa %s962, 1

</llo_original>
